<compile_context>
chip_gen: v7x
topology: tpu7x:2x2x1
jax: 0.10.0
libtpu: 0.0.40
codegen_flags: <defaults>
</compile_context>

<pallas_src>
import functools

import jax
import jax.numpy as jnp
from jax.experimental import pallas as pl
from jax.experimental.pallas import tpu as pltpu


LANE_COLS = 512                        # lane-dense last dim (4 x 128): unmasked stores
MAX_BLOCK_ROWS = 2048                  # 2048 x 512 f32 = 4 MiB per streamed block
VMEM_LIMIT_BYTES = 40 * 1024 * 1024    # explicit scoped-VMEM budget (> v5e's 16 MiB default,
                                       # < every generation's physical VMEM)


def _cdiv(a, b):
    return -(-a // b)


def _round_up(a, m):
    return _cdiv(a, m) * m


@functools.lru_cache(maxsize=1)
def _num_tensorcores():
    """TensorCores the Mosaic 'parallel' grid axis can be split across (defensive)."""
    try:
        info = pltpu.get_tpu_info()
        for attr in ("num_cores", "core_count", "num_tensorcores",
                     "tensorcore_count", "num_cores_per_chip"):
            v = getattr(info, attr, None)
            if isinstance(v, int) and v > 0:
                return v
    except Exception:
        pass
    try:
        kind = jax.devices()[0].device_kind.lower()
        if "v5e" in kind or "v5 lite" in kind or "lite" in kind or "v6" in kind:
            return 1          # single-TensorCore chips
        return 2              # v7x / megacore chips
    except Exception:
        return 2              # harmless over-estimate: only influences block sizing


def _plan_block_rows(rows, cores):
    """Largest ~4 MiB-capped block that divides the buffer and feeds all cores."""
    block_rows = min(MAX_BLOCK_ROWS, _round_up(_cdiv(rows, max(cores, 1)), 8))
    if rows % block_rows != 0:
        # Robust fallback (buffers built by make_grad_buffer never hit this path).
        block_rows = 8
        for cand in range(min(MAX_BLOCK_ROWS, rows), 7, -8):
            if rows % cand == 0:
                block_rows = cand
                break
    return block_rows


# ----------------------------- kernels --------------------------------------

def _sumsq_kernel(g_ref, part_ref):
    """One (8, cols) VPU partial per block; no per-step cross-lane reduce."""
    x = g_ref[...].astype(jnp.float32)
    sq = x * x
    part_ref[...] = jnp.sum(sq.reshape(-1, 8, sq.shape[-1]), axis=0)


def _scale_kernel(coef_ref, g_ref, o_ref):
    """Multiply the gradient stream by a precomputed SMEM scalar coefficient."""
    coef = coef_ref[0]
    o_ref[...] = (g_ref[...].astype(jnp.float32) * coef).astype(o_ref.dtype)


# ----------------------------- wrappers --------------------------------------

def make_grad_buffer(flat_grads):
    """One-time packing of a flat gradient vector into a persistent, lane-dense
    (rows, 512) buffer.

    In a training loop this buffer is created once (or gradients are written
    into it directly), so the per-step clip path has *no* pad / slice / reshape
    HBM traffic.  Padding is zero and stays zero under clipping (0 * coef == 0).
    Returns (buffer, num_valid_elements).
    """
    n = int(flat_grads.shape[0])
    rows_valid = max(_cdiv(n, LANE_COLS), 1)
    cores = _num_tensorcores()
    block_rows = min(MAX_BLOCK_ROWS, _round_up(_cdiv(rows_valid, cores), 8))
    rows = _round_up(rows_valid, block_rows)
    padded = rows * LANE_COLS
    buf = flat_grads
    if padded != n:
        buf = jnp.pad(buf, (0, padded - n))      # one-time cost, not per clip step
    return buf.reshape(rows, LANE_COLS), n


@functools.partial(jax.jit, static_argnames=("max_norm",), donate_argnums=(0,))
def clip_grad_buffer(g2d, *, max_norm=1.0):
    """Global-norm gradient clipping over a persistent (rows, 512) buffer.

    Equivalent to torch.nn.utils.clip_grad_norm_ on the valid elements.  The
    buffer is donated and the scale pass writes in place over it
    (input_output_aliases), so clipping is a genuine 2R + 1W HBM stream.
    """
    rows, cols = g2d.shape
    if cols != LANE_COLS or rows % 8 != 0:
        raise ValueError("clip_grad_buffer expects a buffer from make_grad_buffer")

    cores = _num_tensorcores()
    block_rows = _plan_block_rows(rows, cores)
    n_blocks = rows // block_rows

    # Pass 1: per-block (8, cols) sum-of-squares partials.  The block axis is
    # "parallel", so Mosaic splits it across all TensorCores automatically.
    partials = pl.pallas_call(
        _sumsq_kernel,
        out_shape=jax.ShapeDtypeStruct((n_blocks * 8, cols), jnp.float32),
        grid_spec=pltpu.PrefetchScalarGridSpec(
            num_scalar_prefetch=0,
            grid=(n_blocks,),
            in_specs=[pl.BlockSpec((block_rows, cols), lambda i: (i, 0))],
            out_specs=pl.BlockSpec((8, cols), lambda i: (i, 0)),
        ),
        compiler_params=pltpu.CompilerParams(
            dimension_semantics=("parallel",),
            vmem_limit_bytes=VMEM_LIMIT_BYTES),
    )(g2d)

    # Collapse to the clip coefficient exactly once (tiny array, plain XLA ops)
    # instead of re-reducing / sqrt-ing inside every scale-pass grid step.
    total_sq = jnp.sum(partials, dtype=jnp.float32)
    total_norm = jnp.sqrt(total_sq)
    coef = jnp.minimum(jnp.float32(1.0),
                       jnp.float32(max_norm) / (total_norm + jnp.float32(1e-6)))
    coef = coef.reshape((1,)).astype(jnp.float32)

    # Pass 2: scale the gradient stream in place by the SMEM scalar coefficient.
    clipped = pl.pallas_call(
        _scale_kernel,
        out_shape=jax.ShapeDtypeStruct(g2d.shape, g2d.dtype),
        grid_spec=pltpu.PrefetchScalarGridSpec(
            num_scalar_prefetch=0,
            grid=(n_blocks,),
            in_specs=[
                pl.BlockSpec(memory_space=pltpu.MemorySpace.SMEM),     # coef (1,)
                pl.BlockSpec((block_rows, cols), lambda i: (i, 0)),    # gradients
            ],
            out_specs=pl.BlockSpec((block_rows, cols), lambda i: (i, 0)),
        ),
        input_output_aliases={1: 0},      # clip in place over the donated buffer
        compiler_params=pltpu.CompilerParams(
            dimension_semantics=("parallel",),
            vmem_limit_bytes=VMEM_LIMIT_BYTES),
    )(coef, g2d)
    return clipped


class ModelBasePallas:
    """JAX/Pallas port of ModelBase.

    The base class defines no parameters and forward() returns None.  The
    numerically meaningful method, clip_gradients (global-norm clipping with
    max_norm=1.0), is implemented with Pallas TPU kernels operating on a
    persistent lane-dense gradient buffer (see make_grad_buffer).
    """

    def __init__(self):
        self.do_not_save = False
        self.metric_log_key = None

    def forward(self, batch_representation):
        # Faithful to the reference: abstract base forward has no compute.
        return None

    def clip_gradients(self, grad_buffer: jax.Array,
                       max_norm: float = 1.0) -> jax.Array:
        """grad_buffer: (rows, 512) buffer from make_grad_buffer (padding = 0).
        Returns the clipped buffer (written in place over the donated input)."""
        return clip_grad_buffer(grad_buffer, max_norm=float(max_norm))


# ------------------------------- main ----------------------------------------

if __name__ == "__main__":
    key = jax.random.PRNGKey(0)
    k1, k2, k3 = jax.random.split(key, 3)

    model = ModelBasePallas()

    # forward() input (NCHW as in the PyTorch side); returns None.
    x = jax.random.normal(k1, (2, 4, 16, 16), dtype=jnp.float32)
    assert model.forward(x) is None

    def _ref_clip(g, max_norm=1.0):
        g32 = g.astype(jnp.float32)
        total_norm = jnp.sqrt(jnp.sum(g32 * g32))
        coef = jnp.minimum(1.0, max_norm / (total_norm + 1e-6))
        return (g32 * coef).astype(g.dtype)

    # Small case: 2*4*16*16 = 2048 elements (single block).
    g_small = 3.0 * jax.random.normal(k2, (2 * 4 * 16 * 16,), dtype=jnp.float32)
    buf_small, n_small = make_grad_buffer(g_small)        # one-time packing
    out_small = jax.block_until_ready(model.clip_gradients(buf_small, max_norm=1.0))
    flat_small = out_small.reshape(-1)[:n_small]           # test harness only
    assert bool(jnp.allclose(flat_small, _ref_clip(g_small), rtol=2e-4, atol=1e-6))

    # Larger, non-aligned case: exercises multi-block streaming, the per-block
    # parallel partials and the persistent zero-padded buffer path.
    g_big = 3.0 * jax.random.normal(k3, (1_500_000,), dtype=jnp.float32)
    buf_big, n_big = make_grad_buffer(g_big)
    out_big = jax.block_until_ready(model.clip_gradients(buf_big, max_norm=1.0))
    flat_big = out_big.reshape(-1)[:n_big]                  # test harness only
    assert bool(jnp.allclose(flat_big, _ref_clip(g_big), rtol=2e-4, atol=1e-6))

    print("KERNEL_OK")
</pallas_src>

<mosaic_0001>
module attributes {stable_mosaic.version = 11 : i64} {
  func.func @_sumsq_kernel(%arg0: i32, %arg1: memref<8x512xf32, #tpu.memory_space<vmem>>, %arg2: memref<8x512xf32, #tpu.memory_space<vmem>>) attributes {dimension_semantics = [#tpu.dimension_semantics<parallel>], iteration_bounds = array<i64: 1>, scalar_prefetch = 0 : i64, scratch_operands = 0 : i64, tpu.core_type = #tpu.core_type<tc>, window_params = [{transform_indices = @transform_0, window_bounds = array<i64: 8, 512>}, {transform_indices = @transform_1, window_bounds = array<i64: 8, 512>}]} {
    %c0 = arith.constant 0 : index
    %c0_0 = arith.constant 0 : index
    %0 = vector.load %arg1[%c0, %c0_0] : memref<8x512xf32, #tpu.memory_space<vmem>>, vector<8x512xf32>
    %1 = arith.mulf %0, %0 : vector<8x512xf32>
    %2 = vector.shape_cast %1 : vector<8x512xf32> to vector<1x8x512xf32>
    %cst = arith.constant dense<0.000000e+00> : vector<8x512xf32>
    %3 = vector.multi_reduction <add>, %2, %cst [0] : vector<1x8x512xf32> to vector<8x512xf32>
    %c0_1 = arith.constant 0 : index
    %c0_2 = arith.constant 0 : index
    %4 = vector.load %arg2[%c0_1, %c0_2] : memref<8x512xf32, #tpu.memory_space<vmem>>, vector<8x512xf32>
    tpu.vector_store %arg2[%c0_1, %c0_2], %3 {strides = array<i32>} : memref<8x512xf32, #tpu.memory_space<vmem>>, vector<8x512xf32>,
    return
  }
  func.func @transform_0(%arg0: i32) -> (i32, i32) {
    %c0_i32 = arith.constant 0 : i32
    %c0_i32_0 = arith.constant 0 : i32
    return %arg0, %c0_i32 : i32, i32
  }
  func.func @transform_1(%arg0: i32) -> (i32, i32) {
    %c0_i32 = arith.constant 0 : i32
    %c0_i32_0 = arith.constant 0 : i32
    return %arg0, %c0_i32 : i32, i32
  }
}

module attributes {stable_mosaic.version = 11 : i64} {
  func.func @_scale_kernel(%arg0: i32, %arg1: memref<1xf32, #tpu.memory_space<smem>>, %arg2: memref<8x512xf32, #tpu.memory_space<vmem>>, %arg3: memref<8x512xf32, #tpu.memory_space<vmem>>) attributes {dimension_semantics = [#tpu.dimension_semantics<parallel>], iteration_bounds = array<i64: 1>, scalar_prefetch = 0 : i64, scratch_operands = 0 : i64, tpu.core_type = #tpu.core_type<tc>, window_params = [{transform_indices = @transform_0, window_bounds = array<i64: 1>}, {transform_indices = @transform_1, window_bounds = array<i64: 8, 512>}, {transform_indices = @transform_2, window_bounds = array<i64: 8, 512>}]} {
    %c0 = arith.constant 0 : index
    %0 = memref.load %arg1[%c0] : memref<1xf32, #tpu.memory_space<smem>>
    %c0_0 = arith.constant 0 : index
    %c0_1 = arith.constant 0 : index
    %1 = vector.load %arg2[%c0_0, %c0_1] : memref<8x512xf32, #tpu.memory_space<vmem>>, vector<8x512xf32>
    %2 = vector.broadcast %0 : f32 to vector<8x512xf32>
    %3 = arith.mulf %1, %2 : vector<8x512xf32>
    %c0_2 = arith.constant 0 : index
    %c0_3 = arith.constant 0 : index
    %4 = vector.load %arg3[%c0_2, %c0_3] : memref<8x512xf32, #tpu.memory_space<vmem>>, vector<8x512xf32>
    tpu.vector_store %arg3[%c0_2, %c0_3], %3 {strides = array<i32>} : memref<8x512xf32, #tpu.memory_space<vmem>>, vector<8x512xf32>,
    return
  }
  func.func @transform_0(%arg0: i32) -> i32 {
    %c0_i32 = arith.constant 0 : i32
    %c0_i32_0 = arith.constant 0 : i32
    return %c0_i32 : i32
  }
  func.func @transform_1(%arg0: i32) -> (i32, i32) {
    %c0_i32 = arith.constant 0 : i32
    %c0_i32_0 = arith.constant 0 : i32
    return %arg0, %c0_i32 : i32, i32
  }
  func.func @transform_2(%arg0: i32) -> (i32, i32) {
    %c0_i32 = arith.constant 0 : i32
    %c0_i32_0 = arith.constant 0 : i32
    return %arg0, %c0_i32 : i32, i32
  }
}

</mosaic_0001>

<llo_original>
// kernel: clip_grad_buffer.2
$region0: #{clip_grad_buffer.2}
  #allocation0 [shape = 'u32[]', space=smem, size = 0x4, offset = 0x4, fixed_abs, tag = 'smem constant byte address 0x4 - core index']
  #allocation1 [shape = 'u32[144,128]{1,0:T(1,128)}', space=vmem, size = 0x12000, scoped, tag = 'internal scratch']
  %s0 = inlined_call_operand.hbm [shape: f32[8,512], index: 0, kind: input, shape index: {}]
  %s1 = inlined_call_operand.vmem [shape: f32[8,512], index: 1, kind: output, shape index: {}]
  %s2 = sld [smem:[#allocation0]]
  $region18: #{clip_grad_buffer.2} parent=0
    _
  %s4 = ssub.s32 1, %s2
  %s5 = scalar_select 0, %s4, %s2
  $region1: #{clip_grad_buffer.2} parent=0
    #allocation2 [shape = 'u8[16384]{0}', space=vmem, size = 0x4000, scoped, tag = 'input window, operand 0, single buffered']
    #allocation3 [shape = 's32[1]{0}', space=sflag, size = 0x4, scoped, tag = 'scoped memory for clip_grad_buffer.2']
    %6 = vsyncpa [#allocation3], 0
    // Predicated region
    $region2: #{clip_grad_buffer.2} parent=1 // pred_check
      _
    $region3: #{clip_grad_buffer.2} parent=1 // pred_check_branch
      %8 = sbr.rel (0) target = $region5
    $region4: #{clip_grad_buffer.2} parent=1 // pred_region
      %s10 = ssub.s32 512, 512
      %11 = vsyncadd [#allocation3], %s10
      %s13 = sshll.u32 [#allocation2], 4
      %s14 = int_to_ptr.vmem [resolvable:$true] %s13
      %16 = dma.hbm_to_vmem [thread:$0]  %s0, 512, %s14, [#allocation3]
    $region5: #{clip_grad_buffer.2} parent=1 // pred_fallthru
      _
    // Predicated region
    $region6: #{clip_grad_buffer.2} parent=1 // pred_check
      _
    $region7: #{clip_grad_buffer.2} parent=1 // pred_check_branch
      %18 = sbr.rel (0) target = $region9
    $region8: #{clip_grad_buffer.2} parent=1 // pred_region
      %19 = dma.done [#allocation3], 512
    $region9: #{clip_grad_buffer.2} parent=1 // pred_fallthru
      _
    %v20 = vld [vmem:[#allocation2] sm:$0xff]
    %v21 = vld [vmem:[#allocation2 + $0x8] sm:$0xff]
    %v22 = vld [vmem:[#allocation2 + $0x10] sm:$0xff]
    %v23 = vld [vmem:[#allocation2 + $0x18] sm:$0xff]
    %v24 = vmul.f32 %v20, %v20
    %v25 = vmul.f32 %v21, %v21
    %v26 = vmul.f32 %v22, %v22
    %v27 = vmul.f32 %v23, %v23
    %v28 = vadd.f32 %v24, 0.0
    %v29 = vadd.f32 %v25, 0.0
    %v30 = vadd.f32 %v26, 0.0
    %v31 = vadd.f32 %v27, 0.0
    %32 = vst [vmem:[%s1] sm:$0xff] %v28
    %33 = vst [vmem:[%s1 + $0x8] sm:$0xff] %v29
    %34 = vst [vmem:[%s1 + $0x10] sm:$0xff] %v30
    %35 = vst [vmem:[%s1 + $0x18] sm:$0xff] %v31
    // Predicated region
    $region10: #{clip_grad_buffer.2} parent=1 // pred_check
      _
    $region11: #{clip_grad_buffer.2} parent=1 // pred_check_branch
      %37 = sbr.rel (0) target = $region13
    $region12: #{clip_grad_buffer.2} parent=1 // pred_region
      _
    $region13: #{clip_grad_buffer.2} parent=1 // pred_fallthru
      _
    // Predicated region
    $region14: #{clip_grad_buffer.2} parent=1 // pred_check
      _
    $region15: #{clip_grad_buffer.2} parent=1 // pred_check_branch
      %39 = sbr.rel (0) target = $region17
    $region16: #{clip_grad_buffer.2} parent=1 // pred_region
      _
    $region17: #{clip_grad_buffer.2} parent=1 // pred_fallthru
      _
    %40 = vsyncpa [#allocation3], 1

// kernel: clip_grad_buffer.3
$region0: #{clip_grad_buffer.3}
  #allocation0 [shape = 'u32[]', space=smem, size = 0x4, offset = 0x4, fixed_abs, tag = 'smem constant byte address 0x4 - core index']
  #allocation1 [shape = 'u32[144,128]{1,0:T(1,128)}', space=vmem, size = 0x12000, scoped, tag = 'internal scratch']
  #allocation2 [shape = 'f32[1]{0:T(128)S(6)}', space=smem, size = 0x200, scoped, tag = 'scoped memory for clip_grad_buffer.3']
  %s0 = inlined_call_operand.<no memory space> [shape: f32[1], index: 0, kind: input, shape index: {}]
  %s1 = inlined_call_operand.hbm [shape: f32[8,512], index: 1, kind: input, shape index: {}, may-alias: {1,2}]
  %s2 = inlined_call_operand.hbm [shape: f32[8,512], index: 2, kind: output, shape index: {}, may-alias: {1,2}]
  %s3 = sld [smem:[#allocation0]]
  $region22: #{clip_grad_buffer.3} parent=0
    _
  %s5 = ssub.s32 1, %s3
  %s6 = scalar_select 0, %s5, %s3
  %7 = sst [smem:[#allocation2]] %s0
  $region1: #{clip_grad_buffer.3} parent=0
    #allocation3 [shape = 'u8[16384]{0}', space=vmem, size = 0x4000, scoped, tag = 'input window, operand 1, single buffered']
    #allocation4 [shape = 's32[1]{0}', space=sflag, size = 0x4, scoped, tag = 'scoped memory for clip_grad_buffer.3']
    #allocation5 [shape = 's32[1]{0}', space=sflag, size = 0x4, scoped, tag = 'scoped memory for clip_grad_buffer.3']
    #allocation6 [shape = 'u8[16384]{0}', space=vmem, size = 0x4000, scoped, tag = 'output window, operand 0, single buffered']
    %8 = vsyncpa [#allocation4], 0
    %9 = vsyncpa [#allocation5], 0
    // Predicated region
    $region2: #{clip_grad_buffer.3} parent=1 // pred_check
      _
    $region3: #{clip_grad_buffer.3} parent=1 // pred_check_branch
      %11 = sbr.rel (0) target = $region5
    $region4: #{clip_grad_buffer.3} parent=1 // pred_region
      _
    $region5: #{clip_grad_buffer.3} parent=1 // pred_fallthru
      _
    // Predicated region
    $region6: #{clip_grad_buffer.3} parent=1 // pred_check
      _
    $region7: #{clip_grad_buffer.3} parent=1 // pred_check_branch
      %13 = sbr.rel (0) target = $region9
    $region8: #{clip_grad_buffer.3} parent=1 // pred_region
      %s15 = ssub.s32 512, 512
      %16 = vsyncadd [#allocation4], %s15
      %s18 = sshll.u32 [#allocation3], 4
      %s19 = int_to_ptr.vmem [resolvable:$true] %s18
      %21 = dma.hbm_to_vmem [thread:$0]  %s1, 512, %s19, [#allocation4]
    $region9: #{clip_grad_buffer.3} parent=1 // pred_fallthru
      _
    // Predicated region
    $region10: #{clip_grad_buffer.3} parent=1 // pred_check
      _
    $region11: #{clip_grad_buffer.3} parent=1 // pred_check_branch
      %23 = sbr.rel (0) target = $region13
    $region12: #{clip_grad_buffer.3} parent=1 // pred_region
      %24 = dma.done [#allocation4], 512
    $region13: #{clip_grad_buffer.3} parent=1 // pred_fallthru
      _
    %s25 = sld [smem:[#allocation2]]
    %v26 = vld [vmem:[#allocation3] sm:$0xff]
    %v27 = vld [vmem:[#allocation3 + $0x8] sm:$0xff]
    %v28 = vld [vmem:[#allocation3 + $0x10] sm:$0xff]
    %v29 = vld [vmem:[#allocation3 + $0x18] sm:$0xff]
    %v30 = vstv %s25
    %v31 = vmul.f32 %v26, %v30
    %v32 = vmul.f32 %v27, %v30
    %v33 = vmul.f32 %v28, %v30
    %v34 = vmul.f32 %v29, %v30
    %35 = vst [vmem:[#allocation6] sm:$0xff] %v31
    %36 = vst [vmem:[#allocation6 + $0x8] sm:$0xff] %v32
    %37 = vst [vmem:[#allocation6 + $0x10] sm:$0xff] %v33
    %38 = vst [vmem:[#allocation6 + $0x18] sm:$0xff] %v34
    // Predicated region
    $region14: #{clip_grad_buffer.3} parent=1 // pred_check
      _
    $region15: #{clip_grad_buffer.3} parent=1 // pred_check_branch
      %40 = sbr.rel (0) target = $region17
    $region16: #{clip_grad_buffer.3} parent=1 // pred_region
      %s42 = ssub.s32 512, 512
      %43 = vsyncadd [#allocation5], %s42
      %s45 = sshll.u32 [#allocation6], 4
      %s46 = int_to_ptr.vmem [resolvable:$true] %s45
      %48 = dma.vmem_to_hbm [thread:$0]  %s46, 512, %s2, [#allocation5]
    $region17: #{clip_grad_buffer.3} parent=1 // pred_fallthru
      _
    // Predicated region
    $region18: #{clip_grad_buffer.3} parent=1 // pred_check
      _
    $region19: #{clip_grad_buffer.3} parent=1 // pred_check_branch
      %50 = sbr.rel (0) target = $region21
    $region20: #{clip_grad_buffer.3} parent=1 // pred_region
      %51 = dma.done [#allocation5], 512
    $region21: #{clip_grad_buffer.3} parent=1 // pred_fallthru
      _
    %52 = vsyncpa [#allocation4], 1
    %53 = vsyncpa [#allocation5], 1

</llo_original>
